<compile_context>
chip_gen: v7x
topology: tpu7x:2x2x1
jax: 0.10.0
libtpu: 0.0.40
codegen_flags: <defaults>
</compile_context>

<pallas_src>
import jax
import jax.numpy as jnp
from jax import lax
from jax.experimental import pallas as pl
from jax.experimental.pallas import tpu as pltpu

EPS = 1e-08
SECOND_TERM_COEFF = 1.0  # stands in for args.second_term_coeff


def _fused_mine_kernel(x_ref, y_ref, ys_ref, w2_ref,
                       w1x_ref, w1y_ref, bw_ref, b2_ref, out_ref):
    """One batch tile: both critic passes, sharing hx = x @ W1x.

    out_ref is a (4, TB) block whose rows are [t | w*t | t_shuf | w_shuf*t_shuf],
    i.e. the output is written transposed so every store is lane-dense.
    """
    tb = x_ref.shape[0]

    # First layer.  hx is shared by both branches; both y-branch matmuls are fused
    # into a single (2*TB, Dy) x (Dy, H) MXU issue.
    hx = jnp.dot(x_ref[...], w1x_ref[...],
                 preferred_element_type=jnp.float32)                    # (TB, H)
    y_cat = jnp.concatenate([y_ref[...], ys_ref[...]], axis=0)          # (2TB, Dy)
    hy = jnp.dot(y_cat, w1y_ref[...],
                 preferred_element_type=jnp.float32)                    # (2TB, H)

    bw = bw_ref[...]              # (8, H): row 0 = b1, row 1 = W2 row, rows 2-7 zero
    b1 = bw[0:1, :]               # (1, H)
    b2 = b2_ref[0, 0]             # scalar from SMEM

    h0 = jnp.maximum(hx + hy[:tb, :] + b1, 0.0)                         # (TB, H)
    h1 = jnp.maximum(hx + hy[tb:, :] + b1, 0.0)                         # (TB, H)

    # Width-1 head as an (8, H) x (H, TB) matmul (row 1 carries W2); the result is
    # already lane-dense along the batch, so no transpose / column writes needed.
    dn = (((1,), (1,)), ((), ()))
    r0 = lax.dot_general(bw, h0, dn, preferred_element_type=jnp.float32)  # (8, TB)
    r1 = lax.dot_general(bw, h1, dn, preferred_element_type=jnp.float32)  # (8, TB)
    t = r0[1:2, :] + b2                                                   # (1, TB)
    t_s = r1[1:2, :] + b2                                                 # (1, TB)

    wt = w2_ref[0:1, :] * t
    wt_s = w2_ref[1:2, :] * t_s

    out_ref[0:1, :] = t
    out_ref[1:2, :] = wt
    out_ref[2:3, :] = t_s
    out_ref[3:4, :] = wt_s


def _vmem_bytes(tb, dx, dy, h):
    stream = 2 * 4 * tb * (dx + 2 * dy + 2 + 4)      # double-buffered per-tile streams
    weights = 2 * 4 * ((dx + dy) * h + 8 * h)        # resident weights (default 2 bufs)
    temps = 4 * (2 * tb * dy + 6 * tb * h)           # y_cat, hx, hy, h0, h1 live values
    return stream + weights + temps


def _pick_batch_tile(B, dx, dy, h, budget=36 << 20):
    for tb in (1024, 512, 256, 128):
        if tb > max(B // 2, 128):
            continue   # keep >= 2 tiles when possible (megacore) and avoid over-padding
        if _vmem_bytes(tb, dx, dy, h) <= budget:
            return tb
    return 128


def _run_fused_mine(x, y, y_shuf, w2rows, w1x, w1y, bw, b2):
    B, dx = x.shape
    dy = y.shape[1]
    h = w1x.shape[1]

    tb = _pick_batch_tile(B, dx, dy, h)
    bp = pl.cdiv(B, tb) * tb
    if bp != B:                                  # pad batch to a tile multiple
        pad = bp - B
        x = jnp.pad(x, ((0, pad), (0, 0)))
        y = jnp.pad(y, ((0, pad), (0, 0)))
        y_shuf = jnp.pad(y_shuf, ((0, pad), (0, 0)))
        w2rows = jnp.pad(w2rows, ((0, 0), (0, pad)))

    grid = (bp // tb,)

    row = lambda cols: pl.BlockSpec((tb, cols), lambda i: (i, 0))
    # Replicated weights: constant block index => fetched once, kept resident.
    # TODO(synk): pipeline_mode=pl.Buffered(1) would halve these buffers on
    # VMEM-tight (v7x) configs; kept at the default for maximum compatibility.
    rep = lambda shape: pl.BlockSpec(shape, lambda i: (0, 0))

    in_specs = [
        row(dx), row(dy), row(dy),
        pl.BlockSpec((2, tb), lambda i: (0, i)),             # [w ; w_shuf], lane-dense
        rep((dx, h)), rep((dy, h)), rep((8, h)),
        pl.BlockSpec(memory_space=pltpu.MemorySpace.SMEM),   # b2 scalar
    ]
    out_specs = pl.BlockSpec((4, tb), lambda i: (0, i))

    flops = 2 * bp * h * (dx + 2 * dy + 16) + 6 * bp * h
    bytes_accessed = 4 * (bp * (dx + 2 * dy + 2 + 4) + (dx + dy + 8) * h + 1)
    vmem_limit = int(min(48 << 20, max(32 << 20, _vmem_bytes(tb, dx, dy, h) + (4 << 20))))

    packed = pl.pallas_call(
        _fused_mine_kernel,
        out_shape=jax.ShapeDtypeStruct((4, bp), jnp.float32),
        grid=grid,
        in_specs=in_specs,
        out_specs=out_specs,
        compiler_params=pltpu.CompilerParams(
            dimension_semantics=("parallel",),
            vmem_limit_bytes=vmem_limit),
        cost_estimate=pl.CostEstimate(flops=flops, transcendentals=0,
                                      bytes_accessed=bytes_accessed),
    )(x, y, y_shuf, w2rows, w1x, w1y, bw, b2)

    return packed[:, :B]                          # drop padded columns


@jax.jit
def weighted_mine_forward(params, x, y, w, perm):
    """Mirrors WeightedMine.forward; returns the same 8-tuple."""
    w1x, w1y, bw, b2 = params
    B = x.shape[0]

    # TODO(synk): the permutation gather stays in XLA; DMA-gathering permuted rows
    # inside the kernel only pays off once a y row is >= ~512 B (Dy >= 128 f32).
    y_shuf = y[perm]
    w_shuf = w[perm]

    # Per-sample weights merged into one lane-dense (2, B) stream.
    w2rows = jnp.concatenate([w.reshape(1, B), w_shuf.reshape(1, B)], axis=0)

    packed = _run_fused_mine(x, y, y_shuf, w2rows, w1x, w1y, bw, b2)    # (4, B)
    t = packed[0].reshape(B, 1)
    wt = packed[1].reshape(B, 1)
    t_shuf = packed[2].reshape(B, 1)
    wt_shuf = packed[3].reshape(B, 1)

    first_term = jnp.mean(wt)
    # Plain exp (no max-subtraction) to match the PyTorch reference semantics exactly.
    exp_mean = jnp.mean(jnp.exp(wt_shuf))
    second_term = jnp.log(exp_mean + EPS)
    mi_estimate = first_term - second_term * SECOND_TERM_COEFF

    sg = lax.stop_gradient  # .detach() equivalent
    return (mi_estimate, sg(t), sg(w), sg(t_shuf), sg(wt), sg(wt_shuf),
            sg(first_term), second_term)


def init_params(key, dx, dy, hidden):
    """PyTorch-Linear-style init.  W1 is pre-split into x / y row blocks; b1 and the
    width-1 W2 row are packed into one sublane-aligned (8, H) slab (rows 2-7 zero).
    NOTE: for best TPU efficiency choose `hidden` as a multiple of 128 (lane width).
    """
    k1, k2, k3, k4 = jax.random.split(key, 4)
    din = dx + dy
    lim1 = din ** -0.5
    lim2 = hidden ** -0.5
    w1 = jax.random.uniform(k1, (din, hidden), jnp.float32, -lim1, lim1)
    b1 = jax.random.uniform(k2, (1, hidden), jnp.float32, -lim1, lim1)
    w2_row = jax.random.uniform(k3, (1, hidden), jnp.float32, -lim2, lim2)
    b2 = jax.random.uniform(k4, (1, 1), jnp.float32, -lim2, lim2)
    bw = jnp.concatenate([b1, w2_row, jnp.zeros((6, hidden), jnp.float32)], axis=0)
    return (w1[:dx], w1[dx:], bw, b2)


def _reference_forward(params, x, y, w, perm):
    """Pure-JAX reference for correctness checking (full-precision matmuls)."""
    w1x, w1y, bw, b2 = params
    w1 = jnp.concatenate([w1x, w1y], axis=0)
    b1, w2r = bw[0:1], bw[1:2]
    hp = lax.Precision.HIGHEST

    def T(xx, yy):
        h = jnp.maximum(
            jnp.dot(jnp.concatenate([xx, yy], axis=1), w1, precision=hp) + b1, 0.0)
        return jnp.dot(h, w2r.T, precision=hp) + b2

    t = T(x, y)
    wt = w * t
    first = jnp.mean(wt)
    t_s = T(x, y[perm])
    wt_s = w[perm] * t_s
    second = jnp.log(jnp.mean(jnp.exp(wt_s)) + EPS)
    mi = first - second * SECOND_TERM_COEFF
    return mi, t, t_s, wt, wt_s, first, second


if __name__ == "__main__":
    B, Dx, Dy, H = 8, 16, 16, 32

    key = jax.random.PRNGKey(0)
    kx, ky, kw, kp, kparam = jax.random.split(key, 5)

    x = jax.random.normal(kx, (B, Dx), jnp.float32)
    y = jax.random.normal(ky, (B, Dy), jnp.float32)
    w = jax.random.uniform(kw, (B, 1), jnp.float32, minval=0.1, maxval=1.0)
    perm = jax.random.permutation(kp, B)  # torch.randperm equivalent
    params = init_params(kparam, Dx, Dy, H)

    out = weighted_mine_forward(params, x, y, w, perm)
    jax.block_until_ready(out)

    mi, t, w_out, t_shuf, wt, wt_shuf, first_term, second_term = out
    assert mi.shape == () and t.shape == (B, 1) and wt_shuf.shape == (B, 1)

    # Numerical check against the pure-JAX reference.
    r_mi, r_t, r_ts, r_wt, r_wts, r_first, r_second = _reference_forward(
        params, x, y, w, perm)
    assert jnp.allclose(t, r_t, rtol=2e-3, atol=2e-3)
    assert jnp.allclose(t_shuf, r_ts, rtol=2e-3, atol=2e-3)
    assert jnp.allclose(wt, r_wt, rtol=2e-3, atol=2e-3)
    assert jnp.allclose(wt_shuf, r_wts, rtol=2e-3, atol=2e-3)
    assert jnp.allclose(mi, r_mi, rtol=2e-3, atol=2e-3)

    print("KERNEL_OK")
</pallas_src>

<mosaic_0001>
module attributes {stable_mosaic.version = 11 : i64} {
  func.func @_fused_mine_kernel(%arg0: i32, %arg1: memref<128x16xf32, #tpu.memory_space<vmem>>, %arg2: memref<128x16xf32, #tpu.memory_space<vmem>>, %arg3: memref<128x16xf32, #tpu.memory_space<vmem>>, %arg4: memref<2x128xf32, #tpu.memory_space<vmem>>, %arg5: memref<16x32xf32, #tpu.memory_space<vmem>>, %arg6: memref<16x32xf32, #tpu.memory_space<vmem>>, %arg7: memref<8x32xf32, #tpu.memory_space<vmem>>, %arg8: memref<1x1xf32, #tpu.memory_space<smem>>, %arg9: memref<4x128xf32, #tpu.memory_space<vmem>>) attributes {dimension_semantics = [#tpu.dimension_semantics<parallel>], iteration_bounds = array<i64: 1>, scalar_prefetch = 0 : i64, scratch_operands = 0 : i64, tpu.core_type = #tpu.core_type<tc>, window_params = [{transform_indices = @transform_0, window_bounds = array<i64: 128, 16>}, {transform_indices = @transform_1, window_bounds = array<i64: 128, 16>}, {transform_indices = @transform_2, window_bounds = array<i64: 128, 16>}, {transform_indices = @transform_3, window_bounds = array<i64: 2, 128>}, {pipeline_mode = #tpu.pipeline_mode<synchronous>, transform_indices = @transform_4, window_bounds = array<i64: 16, 32>}, {pipeline_mode = #tpu.pipeline_mode<synchronous>, transform_indices = @transform_5, window_bounds = array<i64: 16, 32>}, {pipeline_mode = #tpu.pipeline_mode<synchronous>, transform_indices = @transform_6, window_bounds = array<i64: 8, 32>}, {transform_indices = @transform_7, window_bounds = array<i64: 1, 1>}, {transform_indices = @transform_8, window_bounds = array<i64: 4, 128>}]} {
    %c0 = arith.constant 0 : index
    %c0_0 = arith.constant 0 : index
    %0 = vector.load %arg1[%c0, %c0_0] : memref<128x16xf32, #tpu.memory_space<vmem>>, vector<128x16xf32>
    %c0_1 = arith.constant 0 : index
    %c0_2 = arith.constant 0 : index
    %1 = vector.load %arg5[%c0_1, %c0_2] : memref<16x32xf32, #tpu.memory_space<vmem>>, vector<16x32xf32>
    %cst = arith.constant dense<0.000000e+00> : vector<128x32xf32>
    %2 = tpu.matmul %0, %1, %cst {dimension_numbers = #tpu.dot_dimension_numbers<[1], [0], [0], [1], [0, 0, 1, 1], [], []>} : vector<128x16xf32>, vector<16x32xf32>, vector<128x32xf32> -> vector<128x32xf32>
    %c0_3 = arith.constant 0 : index
    %c0_4 = arith.constant 0 : index
    %3 = vector.load %arg2[%c0_3, %c0_4] : memref<128x16xf32, #tpu.memory_space<vmem>>, vector<128x16xf32>
    %c0_5 = arith.constant 0 : index
    %c0_6 = arith.constant 0 : index
    %4 = vector.load %arg3[%c0_5, %c0_6] : memref<128x16xf32, #tpu.memory_space<vmem>>, vector<128x16xf32>
    %5 = tpu.concatenate %3, %4 in 0 : vector<128x16xf32>, vector<128x16xf32> -> vector<256x16xf32>
    %c0_7 = arith.constant 0 : index
    %c0_8 = arith.constant 0 : index
    %6 = vector.load %arg6[%c0_7, %c0_8] : memref<16x32xf32, #tpu.memory_space<vmem>>, vector<16x32xf32>
    %cst_9 = arith.constant dense<0.000000e+00> : vector<256x32xf32>
    %7 = tpu.matmul %5, %6, %cst_9 {dimension_numbers = #tpu.dot_dimension_numbers<[1], [0], [0], [1], [0, 0, 1, 1], [], []>} : vector<256x16xf32>, vector<16x32xf32>, vector<256x32xf32> -> vector<256x32xf32>
    %c0_10 = arith.constant 0 : index
    %c0_11 = arith.constant 0 : index
    %8 = vector.load %arg7[%c0_10, %c0_11] : memref<8x32xf32, #tpu.memory_space<vmem>>, vector<8x32xf32>
    %9 = vector.extract_strided_slice %8 {offsets = [0, 0], sizes = [1, 32], strides = [1, 1]} : vector<8x32xf32> to vector<1x32xf32>
    %c0_12 = arith.constant 0 : index
    %c0_13 = arith.constant 0 : index
    %10 = memref.load %arg8[%c0_12, %c0_13] : memref<1x1xf32, #tpu.memory_space<smem>>
    %11 = vector.extract_strided_slice %7 {offsets = [0, 0], sizes = [128, 32], strides = [1, 1]} : vector<256x32xf32> to vector<128x32xf32>
    %12 = arith.addf %2, %11 : vector<128x32xf32>
    %13 = vector.broadcast %9 : vector<1x32xf32> to vector<128x32xf32>
    %14 = arith.addf %12, %13 : vector<128x32xf32>
    %cst_14 = arith.constant 0.000000e+00 : f32
    %15 = vector.broadcast %cst_14 : f32 to vector<128x32xf32>
    %16 = arith.maximumf %14, %15 : vector<128x32xf32>
    %17 = vector.extract_strided_slice %7 {offsets = [128, 0], sizes = [128, 32], strides = [1, 1]} : vector<256x32xf32> to vector<128x32xf32>
    %18 = arith.addf %2, %17 : vector<128x32xf32>
    %19 = vector.broadcast %9 : vector<1x32xf32> to vector<128x32xf32>
    %20 = arith.addf %18, %19 : vector<128x32xf32>
    %cst_15 = arith.constant 0.000000e+00 : f32
    %21 = vector.broadcast %cst_15 : f32 to vector<128x32xf32>
    %22 = arith.maximumf %20, %21 : vector<128x32xf32>
    %cst_16 = arith.constant dense<0.000000e+00> : vector<8x128xf32>
    %23 = tpu.matmul %8, %16, %cst_16 {dimension_numbers = #tpu.dot_dimension_numbers<[1], [1], [0], [0], [0, 0, 1, 0], [], []>} : vector<8x32xf32>, vector<128x32xf32>, vector<8x128xf32> -> vector<8x128xf32>
    %cst_17 = arith.constant dense<0.000000e+00> : vector<8x128xf32>
    %24 = tpu.matmul %8, %22, %cst_17 {dimension_numbers = #tpu.dot_dimension_numbers<[1], [1], [0], [0], [0, 0, 1, 0], [], []>} : vector<8x32xf32>, vector<128x32xf32>, vector<8x128xf32> -> vector<8x128xf32>
    %25 = vector.extract_strided_slice %23 {offsets = [1, 0], sizes = [1, 128], strides = [1, 1]} : vector<8x128xf32> to vector<1x128xf32>
    %26 = vector.broadcast %10 : f32 to vector<1x128xf32>
    %27 = arith.addf %25, %26 : vector<1x128xf32>
    %28 = vector.extract_strided_slice %24 {offsets = [1, 0], sizes = [1, 128], strides = [1, 1]} : vector<8x128xf32> to vector<1x128xf32>
    %29 = vector.broadcast %10 : f32 to vector<1x128xf32>
    %30 = arith.addf %28, %29 : vector<1x128xf32>
    %c0_18 = arith.constant 0 : index
    %c0_19 = arith.constant 0 : index
    %31 = vector.load %arg4[%c0_18, %c0_19] : memref<2x128xf32, #tpu.memory_space<vmem>>, vector<1x128xf32>
    %32 = arith.mulf %31, %27 : vector<1x128xf32>
    %c1 = arith.constant 1 : index
    %c0_20 = arith.constant 0 : index
    %33 = vector.load %arg4[%c1, %c0_20] : memref<2x128xf32, #tpu.memory_space<vmem>>, vector<1x128xf32>
    %34 = arith.mulf %33, %30 : vector<1x128xf32>
    %c0_21 = arith.constant 0 : index
    %c0_22 = arith.constant 0 : index
    %35 = vector.load %arg9[%c0_21, %c0_22] : memref<4x128xf32, #tpu.memory_space<vmem>>, vector<1x128xf32>
    tpu.vector_store %arg9[%c0_21, %c0_22], %27 {strides = array<i32>} : memref<4x128xf32, #tpu.memory_space<vmem>>, vector<1x128xf32>,
    %c1_23 = arith.constant 1 : index
    %c0_24 = arith.constant 0 : index
    %36 = vector.load %arg9[%c1_23, %c0_24] : memref<4x128xf32, #tpu.memory_space<vmem>>, vector<1x128xf32>
    tpu.vector_store %arg9[%c1_23, %c0_24], %32 {strides = array<i32>} : memref<4x128xf32, #tpu.memory_space<vmem>>, vector<1x128xf32>,
    %c2 = arith.constant 2 : index
    %c0_25 = arith.constant 0 : index
    %37 = vector.load %arg9[%c2, %c0_25] : memref<4x128xf32, #tpu.memory_space<vmem>>, vector<1x128xf32>
    tpu.vector_store %arg9[%c2, %c0_25], %30 {strides = array<i32>} : memref<4x128xf32, #tpu.memory_space<vmem>>, vector<1x128xf32>,
    %c3 = arith.constant 3 : index
    %c0_26 = arith.constant 0 : index
    %38 = vector.load %arg9[%c3, %c0_26] : memref<4x128xf32, #tpu.memory_space<vmem>>, vector<1x128xf32>
    tpu.vector_store %arg9[%c3, %c0_26], %34 {strides = array<i32>} : memref<4x128xf32, #tpu.memory_space<vmem>>, vector<1x128xf32>,
    return
  }
  func.func @transform_0(%arg0: i32) -> (i32, i32) {
    %c0_i32 = arith.constant 0 : i32
    %c0_i32_0 = arith.constant 0 : i32
    return %arg0, %c0_i32 : i32, i32
  }
  func.func @transform_1(%arg0: i32) -> (i32, i32) {
    %c0_i32 = arith.constant 0 : i32
    %c0_i32_0 = arith.constant 0 : i32
    return %arg0, %c0_i32 : i32, i32
  }
  func.func @transform_2(%arg0: i32) -> (i32, i32) {
    %c0_i32 = arith.constant 0 : i32
    %c0_i32_0 = arith.constant 0 : i32
    return %arg0, %c0_i32 : i32, i32
  }
  func.func @transform_3(%arg0: i32) -> (i32, i32) {
    %c0_i32 = arith.constant 0 : i32
    %c0_i32_0 = arith.constant 0 : i32
    return %c0_i32, %arg0 : i32, i32
  }
  func.func @transform_4(%arg0: i32) -> (i32, i32) {
    %c0_i32 = arith.constant 0 : i32
    %c0_i32_0 = arith.constant 0 : i32
    %c0_i32_1 = arith.constant 0 : i32
    return %c0_i32, %c0_i32_0 : i32, i32
  }
  func.func @transform_5(%arg0: i32) -> (i32, i32) {
    %c0_i32 = arith.constant 0 : i32
    %c0_i32_0 = arith.constant 0 : i32
    %c0_i32_1 = arith.constant 0 : i32
    return %c0_i32, %c0_i32_0 : i32, i32
  }
  func.func @transform_6(%arg0: i32) -> (i32, i32) {
    %c0_i32 = arith.constant 0 : i32
    %c0_i32_0 = arith.constant 0 : i32
    %c0_i32_1 = arith.constant 0 : i32
    return %c0_i32, %c0_i32_0 : i32, i32
  }
  func.func @transform_7(%arg0: i32) -> (i32, i32) {
    %c0_i32 = arith.constant 0 : i32
    %c0_i32_0 = arith.constant 0 : i32
    %c0_i32_1 = arith.constant 0 : i32
    return %c0_i32, %c0_i32_0 : i32, i32
  }
  func.func @transform_8(%arg0: i32) -> (i32, i32) {
    %c0_i32 = arith.constant 0 : i32
    %c0_i32_0 = arith.constant 0 : i32
    return %c0_i32, %arg0 : i32, i32
  }
}

</mosaic_0001>

<llo_original>
// kernel: weighted_mine_forward.1
$region0: #{weighted_mine_forward.1}
  #allocation0 [shape = 'u32[]', space=smem, size = 0x4, offset = 0x4, fixed_abs, tag = 'smem constant byte address 0x4 - core index']
  #allocation1 [shape = 'u32[144,128]{1,0:T(1,128)}', space=vmem, size = 0x12000, scoped, tag = 'internal scratch']
  #allocation2 [shape = 'f32[1,1]{1,0:T(1,128)S(6)}', space=smem, size = 0x200, scoped, tag = 'scoped memory for weighted_mine_forward.1']
  %s0 = inlined_call_operand.vmem [shape: f32[128,16], index: 0, kind: input, shape index: {}]
  %s1 = inlined_call_operand.vmem [shape: f32[128,16], index: 1, kind: input, shape index: {}]
  %s2 = inlined_call_operand.vmem [shape: f32[128,16], index: 2, kind: input, shape index: {}]
  %s3 = inlined_call_operand.vmem [shape: f32[2,128], index: 3, kind: input, shape index: {}]
  %s4 = inlined_call_operand.vmem [shape: f32[16,32], index: 4, kind: input, shape index: {}]
  %s5 = inlined_call_operand.vmem [shape: f32[16,32], index: 5, kind: input, shape index: {}]
  %s6 = inlined_call_operand.vmem [shape: f32[8,32], index: 6, kind: input, shape index: {}]
  %s7 = inlined_call_operand.<no memory space> [shape: f32[1,1], index: 7, kind: input, shape index: {}]
  %s8 = inlined_call_operand.vmem [shape: f32[4,128], index: 8, kind: output, shape index: {}]
  %s9 = sld [smem:[#allocation0]]
  $region42: #{weighted_mine_forward.1} parent=0
    _
  %s11 = ssub.s32 1, %s9
  %s12 = scalar_select 0, %s11, %s9
  %13 = sst [smem:[#allocation2]] %s7
  // Predicated region
  $region2: #{weighted_mine_forward.1} parent=0 // pred_check
    _
  $region3: #{weighted_mine_forward.1} parent=0 // pred_check_branch
    %15 = sbr.rel (0) target = $region5
  $region4: #{weighted_mine_forward.1} parent=0 // pred_region
    _
  $region5: #{weighted_mine_forward.1} parent=0 // pred_fallthru
    _
  // Predicated region
  $region6: #{weighted_mine_forward.1} parent=0 // pred_check
    _
  $region7: #{weighted_mine_forward.1} parent=0 // pred_check_branch
    %17 = sbr.rel (0) target = $region9
  $region8: #{weighted_mine_forward.1} parent=0 // pred_region
    _
  $region9: #{weighted_mine_forward.1} parent=0 // pred_fallthru
    _
  // Predicated region
  $region10: #{weighted_mine_forward.1} parent=0 // pred_check
    _
  $region11: #{weighted_mine_forward.1} parent=0 // pred_check_branch
    %19 = sbr.rel (0) target = $region13
  $region12: #{weighted_mine_forward.1} parent=0 // pred_region
    _
  $region13: #{weighted_mine_forward.1} parent=0 // pred_fallthru
    _
  // Predicated region
  $region14: #{weighted_mine_forward.1} parent=0 // pred_check
    _
  $region15: #{weighted_mine_forward.1} parent=0 // pred_check_branch
    %21 = sbr.rel (0) target = $region17
  $region16: #{weighted_mine_forward.1} parent=0 // pred_region
    _
  $region17: #{weighted_mine_forward.1} parent=0 // pred_fallthru
    _
  // Predicated region
  $region18: #{weighted_mine_forward.1} parent=0 // pred_check
    _
  $region19: #{weighted_mine_forward.1} parent=0 // pred_check_branch
    %23 = sbr.rel (0) target = $region21
  $region20: #{weighted_mine_forward.1} parent=0 // pred_region
    _
  $region21: #{weighted_mine_forward.1} parent=0 // pred_fallthru
    _
  // Predicated region
  $region22: #{weighted_mine_forward.1} parent=0 // pred_check
    _
  $region23: #{weighted_mine_forward.1} parent=0 // pred_check_branch
    %25 = sbr.rel (0) target = $region25
  $region24: #{weighted_mine_forward.1} parent=0 // pred_region
    _
  $region25: #{weighted_mine_forward.1} parent=0 // pred_fallthru
    _
  // Predicated region
  $region26: #{weighted_mine_forward.1} parent=0 // pred_check
    _
  $region27: #{weighted_mine_forward.1} parent=0 // pred_check_branch
    %27 = sbr.rel (0) target = $region29
  $region28: #{weighted_mine_forward.1} parent=0 // pred_region
    _
  $region29: #{weighted_mine_forward.1} parent=0 // pred_fallthru
    _
  // Predicated region
  $region30: #{weighted_mine_forward.1} parent=0 // pred_check
    _
  $region31: #{weighted_mine_forward.1} parent=0 // pred_check_branch
    %29 = sbr.rel (0) target = $region33
  $region32: #{weighted_mine_forward.1} parent=0 // pred_region
    _
  $region33: #{weighted_mine_forward.1} parent=0 // pred_fallthru
    _
  %v30 = vld [vmem:[%s0] sm:$0xff]
  %v31 = vld [vmem:[%s0 + $0x8] sm:$0xff]
  %v32 = vld [vmem:[%s0 + $0x10] sm:$0xff]
  %v33 = vld [vmem:[%s0 + $0x18] sm:$0xff]
  %v34 = vld [vmem:[%s0 + $0x20] sm:$0xff]
  %v35 = vld [vmem:[%s0 + $0x28] sm:$0xff]
  %v36 = vld [vmem:[%s0 + $0x30] sm:$0xff]
  %v37 = vld [vmem:[%s0 + $0x38] sm:$0xff]
  %v38 = vld [vmem:[%s0 + $0x40] sm:$0xff]
  %v39 = vld [vmem:[%s0 + $0x48] sm:$0xff]
  %v40 = vld [vmem:[%s0 + $0x50] sm:$0xff]
  %v41 = vld [vmem:[%s0 + $0x58] sm:$0xff]
  %v42 = vld [vmem:[%s0 + $0x60] sm:$0xff]
  %v43 = vld [vmem:[%s0 + $0x68] sm:$0xff]
  %v44 = vld [vmem:[%s0 + $0x70] sm:$0xff]
  %v45 = vld [vmem:[%s0 + $0x78] sm:$0xff]
  %v46 = vld [vmem:[%s4] sm:$0xff]
  %v47 = vld [vmem:[%s4 + $0x8] sm:$0xff]
  %vm48 = vcmask 130048
  %v50 = vsel %vm48, %v30, 0
  %v53 = vsel %vm48, %v31, 0
  %v56 = vsel %vm48, %v32, 0
  %v59 = vsel %vm48, %v33, 0
  %v62 = vsel %vm48, %v34, 0
  %v65 = vsel %vm48, %v35, 0
  %v68 = vsel %vm48, %v36, 0
  %v71 = vsel %vm48, %v37, 0
  %v74 = vsel %vm48, %v38, 0
  %v77 = vsel %vm48, %v39, 0
  %v80 = vsel %vm48, %v40, 0
  %v83 = vsel %vm48, %v41, 0
  %v86 = vsel %vm48, %v42, 0
  %v89 = vsel %vm48, %v43, 0
  %v92 = vsel %vm48, %v44, 0
  %v95 = vsel %vm48, %v45, 0
  %97 = vmatprep.subr.mxu0 0.0
  %98 = vmatpush1.msra.mxu0 %v46
  %99 = vmatprep.subr.mxu0 0.0
  %100 = vmatpush1.msra.mxu0 %v47
  %101 = vmatprep.subr.mxu0 0.0
  %102 = vmatpush1.msra.mxu0 0.0
  %103 = vmatprep.subr.mxu0 0.0
  %104 = vmatpush1.msra.mxu0 0.0
  %105 = vmatprep.subr.mxu0 0.0
  %106 = vmatpush1.msra.mxu0 0.0
  %107 = vmatprep.subr.mxu0 0.0
  %108 = vmatpush1.msra.mxu0 0.0
  %109 = vmatprep.subr.mxu0 0.0
  %110 = vmatpush1.msra.mxu0 0.0
  %111 = vmatprep.subr.mxu0 0.0
  %112 = vmatpush1.msra.mxu0 0.0
  %113 = vmatprep.subr.mxu0 0.0
  %114 = vmatpush1.msra.mxu0 0.0
  %115 = vmatprep.subr.mxu0 0.0
  %116 = vmatpush1.msra.mxu0 0.0
  %117 = vmatprep.subr.mxu0 0.0
  %118 = vmatpush1.msra.mxu0 0.0
  %119 = vmatprep.subr.mxu0 0.0
  %120 = vmatpush1.msra.mxu0 0.0
  %121 = vmatprep.subr.mxu0 0.0
  %122 = vmatpush1.msra.mxu0 0.0
  %123 = vmatprep.subr.mxu0 0.0
  %124 = vmatpush1.msra.mxu0 0.0
  %125 = vmatprep.subr.mxu0 0.0
  %126 = vmatpush1.msra.mxu0 0.0
  %127 = vmatprep.subr.mxu0 0.0
  %128 = vmatpush1.msra.mxu0 0.0
  %129 = vmatprep.subr.mxu0 0.0
  %130 = vmatpush1.msra.mxu0 0.0
  %131 = vmatprep.subr.mxu0 0.0
  %132 = vmatpush1.msra.mxu0 0.0
  %133 = vmatprep.subr.mxu0 0.0
  %134 = vmatpush1.msra.mxu0 0.0
  %135 = vmatprep.subr.mxu0 0.0
  %136 = vmatpush1.msra.mxu0 0.0
  %137 = vmatprep.subr.mxu0 0.0
  %138 = vmatpush1.msra.mxu0 0.0
  %139 = vmatprep.subr.mxu0 0.0
  %140 = vmatpush1.msra.mxu0 0.0
  %141 = vmatprep.subr.mxu0 0.0
  %142 = vmatpush1.msra.mxu0 0.0
  %143 = vmatprep.subr.mxu0 0.0
  %144 = vmatpush1.msra.mxu0 0.0
  %145 = vmatprep.subr.mxu0 0.0
  %146 = vmatpush1.msra.mxu0 0.0
  %147 = vmatprep.subr.mxu0 0.0
  %148 = vmatpush1.msra.mxu0 0.0
  %149 = vmatprep.subr.mxu0 0.0
  %150 = vmatpush1.msra.mxu0 0.0
  %151 = vmatprep.subr.mxu0 0.0
  %152 = vmatpush1.msra.mxu0 0.0
  %153 = vmatprep.subr.mxu0 0.0
  %154 = vmatpush1.msra.mxu0 0.0
  %155 = vmatprep.subr.mxu0 0.0
  %156 = vmatpush1.msra.mxu0 0.0
  %157 = vmatprep.subr.mxu0 0.0
  %158 = vmatpush1.msra.mxu0 0.0
  %159 = vmatprep.subr.mxu0 0.0
  %160 = vmatpush1.msra.mxu0 0.0
  %161 = vmatprep.mubr.f32.mxu0 0.0
  %162 = vmatmul.mubr.f32.gmra.mrb[0].mxu0 %v50
  %v163 = vpop.f32.mrb[0].mxu0
  %v164 = vadd.f32 0.0, %v163
  %v165 = vpop.f32.mrb[0].mxu0
  %166 = vmatprep.mubr.f32.mxu0 0.0
  %167 = vmatmul.mubr.f32.gmra.mrb[0].mxu0 %v53
  %v168 = vpop.f32.mrb[0].mxu0
  %v169 = vadd.f32 0.0, %v168
  %v170 = vpop.f32.mrb[0].mxu0
  %171 = vmatprep.mubr.f32.mxu0 0.0
  %172 = vmatmul.mubr.f32.gmra.mrb[0].mxu0 %v56
  %v173 = vpop.f32.mrb[0].mxu0
  %v174 = vadd.f32 0.0, %v173
  %v175 = vpop.f32.mrb[0].mxu0
  %176 = vmatprep.mubr.f32.mxu0 0.0
  %177 = vmatmul.mubr.f32.gmra.mrb[0].mxu0 %v59
  %v178 = vpop.f32.mrb[0].mxu0
  %v179 = vadd.f32 0.0, %v178
  %v180 = vpop.f32.mrb[0].mxu0
  %181 = vmatprep.mubr.f32.mxu0 0.0
  %182 = vmatmul.mubr.f32.gmra.mrb[0].mxu0 %v62
  %v183 = vpop.f32.mrb[0].mxu0
  %v184 = vadd.f32 0.0, %v183
  %v185 = vpop.f32.mrb[0].mxu0
  %186 = vmatprep.mubr.f32.mxu0 0.0
  %187 = vmatmul.mubr.f32.gmra.mrb[0].mxu0 %v65
  %v188 = vpop.f32.mrb[0].mxu0
  %v189 = vadd.f32 0.0, %v188
  %v190 = vpop.f32.mrb[0].mxu0
  %191 = vmatprep.mubr.f32.mxu0 0.0
  %192 = vmatmul.mubr.f32.gmra.mrb[0].mxu0 %v68
  %v193 = vpop.f32.mrb[0].mxu0
  %v194 = vadd.f32 0.0, %v193
  %v195 = vpop.f32.mrb[0].mxu0
  %196 = vmatprep.mubr.f32.mxu0 0.0
  %197 = vmatmul.mubr.f32.gmra.mrb[0].mxu0 %v71
  %v198 = vpop.f32.mrb[0].mxu0
  %v199 = vadd.f32 0.0, %v198
  %v200 = vpop.f32.mrb[0].mxu0
  %201 = vmatprep.mubr.f32.mxu0 0.0
  %202 = vmatmul.mubr.f32.gmra.mrb[0].mxu0 %v74
  %v203 = vpop.f32.mrb[0].mxu0
  %v204 = vadd.f32 0.0, %v203
  %v205 = vpop.f32.mrb[0].mxu0
  %206 = vmatprep.mubr.f32.mxu0 0.0
  %207 = vmatmul.mubr.f32.gmra.mrb[0].mxu0 %v77
  %v208 = vpop.f32.mrb[0].mxu0
  %v209 = vadd.f32 0.0, %v208
  %v210 = vpop.f32.mrb[0].mxu0
  %211 = vmatprep.mubr.f32.mxu0 0.0
  %212 = vmatmul.mubr.f32.gmra.mrb[0].mxu0 %v80
  %v213 = vpop.f32.mrb[0].mxu0
  %v214 = vadd.f32 0.0, %v213
  %v215 = vpop.f32.mrb[0].mxu0
  %216 = vmatprep.mubr.f32.mxu0 0.0
  %217 = vmatmul.mubr.f32.gmra.mrb[0].mxu0 %v83
  %v218 = vpop.f32.mrb[0].mxu0
  %v219 = vadd.f32 0.0, %v218
  %v220 = vpop.f32.mrb[0].mxu0
  %221 = vmatprep.mubr.f32.mxu0 0.0
  %222 = vmatmul.mubr.f32.gmra.mrb[0].mxu0 %v86
  %v223 = vpop.f32.mrb[0].mxu0
  %v224 = vadd.f32 0.0, %v223
  %v225 = vpop.f32.mrb[0].mxu0
  %226 = vmatprep.mubr.f32.mxu0 0.0
  %227 = vmatmul.mubr.f32.gmra.mrb[0].mxu0 %v89
  %v228 = vpop.f32.mrb[0].mxu0
  %v229 = vadd.f32 0.0, %v228
  %v230 = vpop.f32.mrb[0].mxu0
  %231 = vmatprep.mubr.f32.mxu0 0.0
  %232 = vmatmul.mubr.f32.gmra.mrb[0].mxu0 %v92
  %v233 = vpop.f32.mrb[0].mxu0
  %v234 = vadd.f32 0.0, %v233
  %v235 = vpop.f32.mrb[0].mxu0
  %236 = vmatprep.mubr.f32.mxu0 0.0
  %237 = vmatmul.mubr.f32.gmra.mrb[0].mxu0 %v95
  %v238 = vpop.f32.mrb[0].mxu0
  %v239 = vadd.f32 0.0, %v238
  %v240 = vpop.f32.mrb[0].mxu0
  %241 = vdwg.mxu0
  %v242 = vld [vmem:[%s1] sm:$0xff]
  %v243 = vld [vmem:[%s1 + $0x8] sm:$0xff]
  %v244 = vld [vmem:[%s1 + $0x10] sm:$0xff]
  %v245 = vld [vmem:[%s1 + $0x18] sm:$0xff]
  %v246 = vld [vmem:[%s1 + $0x20] sm:$0xff]
  %v247 = vld [vmem:[%s1 + $0x28] sm:$0xff]
  %v248 = vld [vmem:[%s1 + $0x30] sm:$0xff]
  %v249 = vld [vmem:[%s1 + $0x38] sm:$0xff]
  %v250 = vld [vmem:[%s1 + $0x40] sm:$0xff]
  %v251 = vld [vmem:[%s1 + $0x48] sm:$0xff]
  %v252 = vld [vmem:[%s1 + $0x50] sm:$0xff]
  %v253 = vld [vmem:[%s1 + $0x58] sm:$0xff]
  %v254 = vld [vmem:[%s1 + $0x60] sm:$0xff]
  %v255 = vld [vmem:[%s1 + $0x68] sm:$0xff]
  %v256 = vld [vmem:[%s1 + $0x70] sm:$0xff]
  %v257 = vld [vmem:[%s1 + $0x78] sm:$0xff]
  %v258 = vld [vmem:[%s2] sm:$0xff]
  %v259 = vld [vmem:[%s2 + $0x8] sm:$0xff]
  %v260 = vld [vmem:[%s2 + $0x10] sm:$0xff]
  %v261 = vld [vmem:[%s2 + $0x18] sm:$0xff]
  %v262 = vld [vmem:[%s2 + $0x20] sm:$0xff]
  %v263 = vld [vmem:[%s2 + $0x28] sm:$0xff]
  %v264 = vld [vmem:[%s2 + $0x30] sm:$0xff]
  %v265 = vld [vmem:[%s2 + $0x38] sm:$0xff]
  %v266 = vld [vmem:[%s2 + $0x40] sm:$0xff]
  %v267 = vld [vmem:[%s2 + $0x48] sm:$0xff]
  %v268 = vld [vmem:[%s2 + $0x50] sm:$0xff]
  %v269 = vld [vmem:[%s2 + $0x58] sm:$0xff]
  %v270 = vld [vmem:[%s2 + $0x60] sm:$0xff]
  %v271 = vld [vmem:[%s2 + $0x68] sm:$0xff]
  %v272 = vld [vmem:[%s2 + $0x70] sm:$0xff]
  %v273 = vld [vmem:[%s2 + $0x78] sm:$0xff]
  %v274 = vld [vmem:[%s5] sm:$0xff]
  %v275 = vld [vmem:[%s5 + $0x8] sm:$0xff]
  %v277 = vsel %vm48, %v242, 0
  %v280 = vsel %vm48, %v243, 0
  %v283 = vsel %vm48, %v244, 0
  %v286 = vsel %vm48, %v245, 0
  %v289 = vsel %vm48, %v246, 0
  %v292 = vsel %vm48, %v247, 0
  %v295 = vsel %vm48, %v248, 0
  %v298 = vsel %vm48, %v249, 0
  %v301 = vsel %vm48, %v250, 0
  %v304 = vsel %vm48, %v251, 0
  %v307 = vsel %vm48, %v252, 0
  %v310 = vsel %vm48, %v253, 0
  %v313 = vsel %vm48, %v254, 0
  %v316 = vsel %vm48, %v255, 0
  %v319 = vsel %vm48, %v256, 0
  %v322 = vsel %vm48, %v257, 0
  %v325 = vsel %vm48, %v258, 0
  %v328 = vsel %vm48, %v259, 0
  %v331 = vsel %vm48, %v260, 0
  %v334 = vsel %vm48, %v261, 0
  %v337 = vsel %vm48, %v262, 0
  %v340 = vsel %vm48, %v263, 0
  %v343 = vsel %vm48, %v264, 0
  %v346 = vsel %vm48, %v265, 0
  %v349 = vsel %vm48, %v266, 0
  %v352 = vsel %vm48, %v267, 0
  %v355 = vsel %vm48, %v268, 0
  %v358 = vsel %vm48, %v269, 0
  %v361 = vsel %vm48, %v270, 0
  %v364 = vsel %vm48, %v271, 0
  %v367 = vsel %vm48, %v272, 0
  %v370 = vsel %vm48, %v273, 0
  %372 = vmatprep.subr.mxu0 0.0
  %373 = vmatpush1.msra.mxu0 %v274
  %374 = vmatprep.subr.mxu0 0.0
  %375 = vmatpush1.msra.mxu0 %v275
  %376 = vmatprep.subr.mxu0 0.0
  %377 = vmatpush1.msra.mxu0 0.0
  %378 = vmatprep.subr.mxu0 0.0
  %379 = vmatpush1.msra.mxu0 0.0
  %380 = vmatprep.subr.mxu0 0.0
  %381 = vmatpush1.msra.mxu0 0.0
  %382 = vmatprep.subr.mxu0 0.0
  %383 = vmatpush1.msra.mxu0 0.0
  %384 = vmatprep.subr.mxu0 0.0
  %385 = vmatpush1.msra.mxu0 0.0
  %386 = vmatprep.subr.mxu0 0.0
  %387 = vmatpush1.msra.mxu0 0.0
  %388 = vmatprep.subr.mxu0 0.0
  %389 = vmatpush1.msra.mxu0 0.0
  %390 = vmatprep.subr.mxu0 0.0
  %391 = vmatpush1.msra.mxu0 0.0
  %392 = vmatprep.subr.mxu0 0.0
  %393 = vmatpush1.msra.mxu0 0.0
  %394 = vmatprep.subr.mxu0 0.0
  %395 = vmatpush1.msra.mxu0 0.0
  %396 = vmatprep.subr.mxu0 0.0
  %397 = vmatpush1.msra.mxu0 0.0
  %398 = vmatprep.subr.mxu0 0.0
  %399 = vmatpush1.msra.mxu0 0.0
  %400 = vmatprep.subr.mxu0 0.0
  %401 = vmatpush1.msra.mxu0 0.0
  %402 = vmatprep.subr.mxu0 0.0
  %403 = vmatpush1.msra.mxu0 0.0
  %404 = vmatprep.subr.mxu0 0.0
  %405 = vmatpush1.msra.mxu0 0.0
  %406 = vmatprep.subr.mxu0 0.0
  %407 = vmatpush1.msra.mxu0 0.0
  %408 = vmatprep.subr.mxu0 0.0
  %409 = vmatpush1.msra.mxu0 0.0
  %410 = vmatprep.subr.mxu0 0.0
  %411 = vmatpush1.msra.mxu0 0.0
  %412 = vmatprep.subr.mxu0 0.0
  %413 = vmatpush1.msra.mxu0 0.0
  %414 = vmatprep.subr.mxu0 0.0
  %415 = vmatpush1.msra.mxu0 0.0
  %416 = vmatprep.subr.mxu0 0.0
  %417 = vmatpush1.msra.mxu0 0.0
  %418 = vmatprep.subr.mxu0 0.0
  %419 = vmatpush1.msra.mxu0 0.0
  %420 = vmatprep.subr.mxu0 0.0
  %421 = vmatpush1.msra.mxu0 0.0
  %422 = vmatprep.subr.mxu0 0.0
  %423 = vmatpush1.msra.mxu0 0.0
  %424 = vmatprep.subr.mxu0 0.0
  %425 = vmatpush1.msra.mxu0 0.0
  %426 = vmatprep.subr.mxu0 0.0
  %427 = vmatpush1.msra.mxu0 0.0
  %428 = vmatprep.subr.mxu0 0.0
  %429 = vmatpush1.msra.mxu0 0.0
  %430 = vmatprep.subr.mxu0 0.0
  %431 = vmatpush1.msra.mxu0 0.0
  %432 = vmatprep.subr.mxu0 0.0
  %433 = vmatpush1.msra.mxu0 0.0
  %434 = vmatprep.subr.mxu0 0.0
  %435 = vmatpush1.msra.mxu0 0.0
  %436 = vmatprep.mubr.f32.mxu0 0.0
  %437 = vmatmul.mubr.f32.gmra.mrb[0].mxu0 %v277
  %v438 = vpop.f32.mrb[0].mxu0
  %v439 = vadd.f32 0.0, %v438
  %v440 = vpop.f32.mrb[0].mxu0
  %441 = vmatprep.mubr.f32.mxu0 0.0
  %442 = vmatmul.mubr.f32.gmra.mrb[0].mxu0 %v280
  %v443 = vpop.f32.mrb[0].mxu0
  %v444 = vadd.f32 0.0, %v443
  %v445 = vpop.f32.mrb[0].mxu0
  %446 = vmatprep.mubr.f32.mxu0 0.0
  %447 = vmatmul.mubr.f32.gmra.mrb[0].mxu0 %v283
  %v448 = vpop.f32.mrb[0].mxu0
  %v449 = vadd.f32 0.0, %v448
  %v450 = vpop.f32.mrb[0].mxu0
  %451 = vmatprep.mubr.f32.mxu0 0.0
  %452 = vmatmul.mubr.f32.gmra.mrb[0].mxu0 %v286
  %v453 = vpop.f32.mrb[0].mxu0
  %v454 = vadd.f32 0.0, %v453
  %v455 = vpop.f32.mrb[0].mxu0
  %456 = vmatprep.mubr.f32.mxu0 0.0
  %457 = vmatmul.mubr.f32.gmra.mrb[0].mxu0 %v289
  %v458 = vpop.f32.mrb[0].mxu0
  %v459 = vadd.f32 0.0, %v458
  %v460 = vpop.f32.mrb[0].mxu0
  %461 = vmatprep.mubr.f32.mxu0 0.0
  %462 = vmatmul.mubr.f32.gmra.mrb[0].mxu0 %v292
  %v463 = vpop.f32.mrb[0].mxu0
  %v464 = vadd.f32 0.0, %v463
  %v465 = vpop.f32.mrb[0].mxu0
  %466 = vmatprep.mubr.f32.mxu0 0.0
  %467 = vmatmul.mubr.f32.gmra.mrb[0].mxu0 %v295
  %v468 = vpop.f32.mrb[0].mxu0
  %v469 = vadd.f32 0.0, %v468
  %v470 = vpop.f32.mrb[0].mxu0
  %471 = vmatprep.mubr.f32.mxu0 0.0
  %472 = vmatmul.mubr.f32.gmra.mrb[0].mxu0 %v298
  %v473 = vpop.f32.mrb[0].mxu0
  %v474 = vadd.f32 0.0, %v473
  %v475 = vpop.f32.mrb[0].mxu0
  %476 = vmatprep.mubr.f32.mxu0 0.0
  %477 = vmatmul.mubr.f32.gmra.mrb[0].mxu0 %v301
  %v478 = vpop.f32.mrb[0].mxu0
  %v479 = vadd.f32 0.0, %v478
  %v480 = vpop.f32.mrb[0].mxu0
  %481 = vmatprep.mubr.f32.mxu0 0.0
  %482 = vmatmul.mubr.f32.gmra.mrb[0].mxu0 %v304
  %v483 = vpop.f32.mrb[0].mxu0
  %v484 = vadd.f32 0.0, %v483
  %v485 = vpop.f32.mrb[0].mxu0
  %486 = vmatprep.mubr.f32.mxu0 0.0
  %487 = vmatmul.mubr.f32.gmra.mrb[0].mxu0 %v307
  %v488 = vpop.f32.mrb[0].mxu0
  %v489 = vadd.f32 0.0, %v488
  %v490 = vpop.f32.mrb[0].mxu0
  %491 = vmatprep.mubr.f32.mxu0 0.0
  %492 = vmatmul.mubr.f32.gmra.mrb[0].mxu0 %v310
  %v493 = vpop.f32.mrb[0].mxu0
  %v494 = vadd.f32 0.0, %v493
  %v495 = vpop.f32.mrb[0].mxu0
  %496 = vmatprep.mubr.f32.mxu0 0.0
  %497 = vmatmul.mubr.f32.gmra.mrb[0].mxu0 %v313
  %v498 = vpop.f32.mrb[0].mxu0
  %v499 = vadd.f32 0.0, %v498
  %v500 = vpop.f32.mrb[0].mxu0
  %501 = vmatprep.mubr.f32.mxu0 0.0
  %502 = vmatmul.mubr.f32.gmra.mrb[0].mxu0 %v316
  %v503 = vpop.f32.mrb[0].mxu0
  %v504 = vadd.f32 0.0, %v503
  %v505 = vpop.f32.mrb[0].mxu0
  %506 = vmatprep.mubr.f32.mxu0 0.0
  %507 = vmatmul.mubr.f32.gmra.mrb[0].mxu0 %v319
  %v508 = vpop.f32.mrb[0].mxu0
  %v509 = vadd.f32 0.0, %v508
  %v510 = vpop.f32.mrb[0].mxu0
  %511 = vmatprep.mubr.f32.mxu0 0.0
  %512 = vmatmul.mubr.f32.gmra.mrb[0].mxu0 %v322
  %v513 = vpop.f32.mrb[0].mxu0
  %v514 = vadd.f32 0.0, %v513
  %v515 = vpop.f32.mrb[0].mxu0
  %516 = vmatprep.mubr.f32.mxu0 0.0
  %517 = vmatmul.mubr.f32.gmra.mrb[0].mxu0 %v325
  %v518 = vpop.f32.mrb[0].mxu0
  %v519 = vadd.f32 0.0, %v518
  %v520 = vpop.f32.mrb[0].mxu0
  %521 = vmatprep.mubr.f32.mxu0 0.0
  %522 = vmatmul.mubr.f32.gmra.mrb[0].mxu0 %v328
  %v523 = vpop.f32.mrb[0].mxu0
  %v524 = vadd.f32 0.0, %v523
  %v525 = vpop.f32.mrb[0].mxu0
  %526 = vmatprep.mubr.f32.mxu0 0.0
  %527 = vmatmul.mubr.f32.gmra.mrb[0].mxu0 %v331
  %v528 = vpop.f32.mrb[0].mxu0
  %v529 = vadd.f32 0.0, %v528
  %v530 = vpop.f32.mrb[0].mxu0
  %531 = vmatprep.mubr.f32.mxu0 0.0
  %532 = vmatmul.mubr.f32.gmra.mrb[0].mxu0 %v334
  %v533 = vpop.f32.mrb[0].mxu0
  %v534 = vadd.f32 0.0, %v533
  %v535 = vpop.f32.mrb[0].mxu0
  %536 = vmatprep.mubr.f32.mxu0 0.0
  %537 = vmatmul.mubr.f32.gmra.mrb[0].mxu0 %v337
  %v538 = vpop.f32.mrb[0].mxu0
  %v539 = vadd.f32 0.0, %v538
  %v540 = vpop.f32.mrb[0].mxu0
  %541 = vmatprep.mubr.f32.mxu0 0.0
  %542 = vmatmul.mubr.f32.gmra.mrb[0].mxu0 %v340
  %v543 = vpop.f32.mrb[0].mxu0
  %v544 = vadd.f32 0.0, %v543
  %v545 = vpop.f32.mrb[0].mxu0
  %546 = vmatprep.mubr.f32.mxu0 0.0
  %547 = vmatmul.mubr.f32.gmra.mrb[0].mxu0 %v343
  %v548 = vpop.f32.mrb[0].mxu0
  %v549 = vadd.f32 0.0, %v548
  %v550 = vpop.f32.mrb[0].mxu0
  %551 = vmatprep.mubr.f32.mxu0 0.0
  %552 = vmatmul.mubr.f32.gmra.mrb[0].mxu0 %v346
  %v553 = vpop.f32.mrb[0].mxu0
  %v554 = vadd.f32 0.0, %v553
  %v555 = vpop.f32.mrb[0].mxu0
  %556 = vmatprep.mubr.f32.mxu0 0.0
  %557 = vmatmul.mubr.f32.gmra.mrb[0].mxu0 %v349
  %v558 = vpop.f32.mrb[0].mxu0
  %v559 = vadd.f32 0.0, %v558
  %v560 = vpop.f32.mrb[0].mxu0
  %561 = vmatprep.mubr.f32.mxu0 0.0
  %562 = vmatmul.mubr.f32.gmra.mrb[0].mxu0 %v352
  %v563 = vpop.f32.mrb[0].mxu0
  %v564 = vadd.f32 0.0, %v563
  %v565 = vpop.f32.mrb[0].mxu0
  %566 = vmatprep.mubr.f32.mxu0 0.0
  %567 = vmatmul.mubr.f32.gmra.mrb[0].mxu0 %v355
  %v568 = vpop.f32.mrb[0].mxu0
  %v569 = vadd.f32 0.0, %v568
  %v570 = vpop.f32.mrb[0].mxu0
  %571 = vmatprep.mubr.f32.mxu0 0.0
  %572 = vmatmul.mubr.f32.gmra.mrb[0].mxu0 %v358
  %v573 = vpop.f32.mrb[0].mxu0
  %v574 = vadd.f32 0.0, %v573
  %v575 = vpop.f32.mrb[0].mxu0
  %576 = vmatprep.mubr.f32.mxu0 0.0
  %577 = vmatmul.mubr.f32.gmra.mrb[0].mxu0 %v361
  %v578 = vpop.f32.mrb[0].mxu0
  %v579 = vadd.f32 0.0, %v578
  %v580 = vpop.f32.mrb[0].mxu0
  %581 = vmatprep.mubr.f32.mxu0 0.0
  %582 = vmatmul.mubr.f32.gmra.mrb[0].mxu0 %v364
  %v583 = vpop.f32.mrb[0].mxu0
  %v584 = vadd.f32 0.0, %v583
  %v585 = vpop.f32.mrb[0].mxu0
  %586 = vmatprep.mubr.f32.mxu0 0.0
  %587 = vmatmul.mubr.f32.gmra.mrb[0].mxu0 %v367
  %v588 = vpop.f32.mrb[0].mxu0
  %v589 = vadd.f32 0.0, %v588
  %v590 = vpop.f32.mrb[0].mxu0
  %591 = vmatprep.mubr.f32.mxu0 0.0
  %592 = vmatmul.mubr.f32.gmra.mrb[0].mxu0 %v370
  %v593 = vpop.f32.mrb[0].mxu0
  %v594 = vadd.f32 0.0, %v593
  %v595 = vpop.f32.mrb[0].mxu0
  %596 = vdwg.mxu0
  %v597 = vld [vmem:[%s6] sm:$0xff]
  %s598 = sld [smem:[#allocation2]]
  %v599 = vadd.f32 %v164, %v439
  %v600 = vadd.f32 %v169, %v444
  %v601 = vadd.f32 %v174, %v449
  %v602 = vadd.f32 %v179, %v454
  %v603 = vadd.f32 %v184, %v459
  %v604 = vadd.f32 %v189, %v464
  %v605 = vadd.f32 %v194, %v469
  %v606 = vadd.f32 %v199, %v474
  %v607 = vadd.f32 %v204, %v479
  %v608 = vadd.f32 %v209, %v484
  %v609 = vadd.f32 %v214, %v489
  %v610 = vadd.f32 %v219, %v494
  %v611 = vadd.f32 %v224, %v499
  %v612 = vadd.f32 %v229, %v504
  %v613 = vadd.f32 %v234, %v509
  %v614 = vadd.f32 %v239, %v514
  %v615 = vlaneseq
  %v616 = vshrl.u32 %v615, 7
  %v617 = vsub.s32 0, %v616
  %v618 = vrot.slane %v597, %v617
  %v619 = vadd.f32 %v599, %v618
  %v620 = vadd.f32 %v600, %v618
  %v621 = vadd.f32 %v601, %v618
  %v622 = vadd.f32 %v602, %v618
  %v623 = vadd.f32 %v603, %v618
  %v624 = vadd.f32 %v604, %v618
  %v625 = vadd.f32 %v605, %v618
  %v626 = vadd.f32 %v606, %v618
  %v627 = vadd.f32 %v607, %v618
  %v628 = vadd.f32 %v608, %v618
  %v629 = vadd.f32 %v609, %v618
  %v630 = vadd.f32 %v610, %v618
  %v631 = vadd.f32 %v611, %v618
  %v632 = vadd.f32 %v612, %v618
  %v633 = vadd.f32 %v613, %v618
  %v634 = vadd.f32 %v614, %v618
  %v635 = vmax.f32 %v619, 0.0
  %v636 = vmax.f32 %v620, 0.0
  %v637 = vmax.f32 %v621, 0.0
  %v638 = vmax.f32 %v622, 0.0
  %v639 = vmax.f32 %v623, 0.0
  %v640 = vmax.f32 %v624, 0.0
  %v641 = vmax.f32 %v625, 0.0
  %v642 = vmax.f32 %v626, 0.0
  %v643 = vmax.f32 %v627, 0.0
  %v644 = vmax.f32 %v628, 0.0
  %v645 = vmax.f32 %v629, 0.0
  %v646 = vmax.f32 %v630, 0.0
  %v647 = vmax.f32 %v631, 0.0
  %v648 = vmax.f32 %v632, 0.0
  %v649 = vmax.f32 %v633, 0.0
  %v650 = vmax.f32 %v634, 0.0
  %v651 = vadd.f32 %v164, %v519
  %v652 = vadd.f32 %v169, %v524
  %v653 = vadd.f32 %v174, %v529
  %v654 = vadd.f32 %v179, %v534
  %v655 = vadd.f32 %v184, %v539
  %v656 = vadd.f32 %v189, %v544
  %v657 = vadd.f32 %v194, %v549
  %v658 = vadd.f32 %v199, %v554
  %v659 = vadd.f32 %v204, %v559
  %v660 = vadd.f32 %v209, %v564
  %v661 = vadd.f32 %v214, %v569
  %v662 = vadd.f32 %v219, %v574
  %v663 = vadd.f32 %v224, %v579
  %v664 = vadd.f32 %v229, %v584
  %v665 = vadd.f32 %v234, %v589
  %v666 = vadd.f32 %v239, %v594
  %v667 = vadd.f32 %v651, %v618
  %v668 = vadd.f32 %v652, %v618
  %v669 = vadd.f32 %v653, %v618
  %v670 = vadd.f32 %v654, %v618
  %v671 = vadd.f32 %v655, %v618
  %v672 = vadd.f32 %v656, %v618
  %v673 = vadd.f32 %v657, %v618
  %v674 = vadd.f32 %v658, %v618
  %v675 = vadd.f32 %v659, %v618
  %v676 = vadd.f32 %v660, %v618
  %v677 = vadd.f32 %v661, %v618
  %v678 = vadd.f32 %v662, %v618
  %v679 = vadd.f32 %v663, %v618
  %v680 = vadd.f32 %v664, %v618
  %v681 = vadd.f32 %v665, %v618
  %v682 = vadd.f32 %v666, %v618
  %v683 = vmax.f32 %v667, 0.0
  %v684 = vmax.f32 %v668, 0.0
  %v685 = vmax.f32 %v669, 0.0
  %v686 = vmax.f32 %v670, 0.0
  %v687 = vmax.f32 %v671, 0.0
  %v688 = vmax.f32 %v672, 0.0
  %v689 = vmax.f32 %v673, 0.0
  %v690 = vmax.f32 %v674, 0.0
  %v691 = vmax.f32 %v675, 0.0
  %v692 = vmax.f32 %v676, 0.0
  %v693 = vmax.f32 %v677, 0.0
  %v694 = vmax.f32 %v678, 0.0
  %v695 = vmax.f32 %v679, 0.0
  %v696 = vmax.f32 %v680, 0.0
  %v697 = vmax.f32 %v681, 0.0
  %v698 = vmax.f32 %v682, 0.0
  %vm699 = vcmask 261120
  %v701 = vsel %vm699, %v597, 0
  %v704 = vsel %vm699, %v635, 0
  %v707 = vsel %vm699, %v636, 0
  %v710 = vsel %vm699, %v637, 0
  %v713 = vsel %vm699, %v638, 0
  %v716 = vsel %vm699, %v639, 0
  %v719 = vsel %vm699, %v640, 0
  %v722 = vsel %vm699, %v641, 0
  %v725 = vsel %vm699, %v642, 0
  %v728 = vsel %vm699, %v643, 0
  %v731 = vsel %vm699, %v644, 0
  %v734 = vsel %vm699, %v645, 0
  %v737 = vsel %vm699, %v646, 0
  %v740 = vsel %vm699, %v647, 0
  %v743 = vsel %vm699, %v648, 0
  %v746 = vsel %vm699, %v649, 0
  %v749 = vsel %vm699, %v650, 0
  %751 = vmatprep.subr.mxu0 0.0
  %752 = vmatpush1.xpose.msra.mxu0 %v704
  %753 = vmatprep.subr.mxu0 0.0
  %754 = vmatpush1.xpose.msra.mxu0 %v707
  %755 = vmatprep.subr.mxu0 0.0
  %756 = vmatpush1.xpose.msra.mxu0 %v710
  %757 = vmatprep.subr.mxu0 0.0
  %758 = vmatpush1.xpose.msra.mxu0 %v713
  %759 = vmatprep.subr.mxu0 0.0
  %760 = vmatpush1.xpose.msra.mxu0 %v716
  %761 = vmatprep.subr.mxu0 0.0
  %762 = vmatpush1.xpose.msra.mxu0 %v719
  %763 = vmatprep.subr.mxu0 0.0
  %764 = vmatpush1.xpose.msra.mxu0 %v722
  %765 = vmatprep.subr.mxu0 0.0
  %766 = vmatpush1.xpose.msra.mxu0 %v725
  %767 = vmatprep.subr.mxu0 0.0
  %768 = vmatpush1.xpose.msra.mxu0 %v728
  %769 = vmatprep.subr.mxu0 0.0
  %770 = vmatpush1.xpose.msra.mxu0 %v731
  %771 = vmatprep.subr.mxu0 0.0
  %772 = vmatpush1.xpose.msra.mxu0 %v734
  %773 = vmatprep.subr.mxu0 0.0
  %774 = vmatpush1.xpose.msra.mxu0 %v737
  %775 = vmatprep.subr.mxu0 0.0
  %776 = vmatpush1.xpose.msra.mxu0 %v740
  %777 = vmatprep.subr.mxu0 0.0
  %778 = vmatpush1.xpose.msra.mxu0 %v743
  %779 = vmatprep.subr.mxu0 0.0
  %780 = vmatpush1.xpose.msra.mxu0 %v746
  %781 = vmatprep.subr.mxu0 0.0
  %782 = vmatpush1.xpose.msra.mxu0 %v749
  %783 = vmatprep.subr.mxu0 0.0
  %784 = vmatpush1.xpose.msra.mxu0 0.0
  %785 = vmatprep.subr.mxu0 0.0
  %786 = vmatpush1.xpose.msra.mxu0 0.0
  %787 = vmatprep.subr.mxu0 0.0
  %788 = vmatpush1.xpose.msra.mxu0 0.0
  %789 = vmatprep.subr.mxu0 0.0
  %790 = vmatpush1.xpose.msra.mxu0 0.0
  %791 = vmatprep.subr.mxu0 0.0
  %792 = vmatpush1.xpose.msra.mxu0 0.0
  %793 = vmatprep.subr.mxu0 0.0
  %794 = vmatpush1.xpose.msra.mxu0 0.0
  %795 = vmatprep.subr.mxu0 0.0
  %796 = vmatpush1.xpose.msra.mxu0 0.0
  %797 = vmatprep.subr.mxu0 0.0
  %798 = vmatpush1.xpose.msra.mxu0 0.0
  %799 = vmatprep.subr.mxu0 0.0
  %800 = vmatpush1.xpose.msra.mxu0 0.0
  %801 = vmatprep.subr.mxu0 0.0
  %802 = vmatpush1.xpose.msra.mxu0 0.0
  %803 = vmatprep.subr.mxu0 0.0
  %804 = vmatpush1.xpose.msra.mxu0 0.0
  %805 = vmatprep.subr.mxu0 0.0
  %806 = vmatpush1.xpose.msra.mxu0 0.0
  %807 = vmatprep.subr.mxu0 0.0
  %808 = vmatpush1.xpose.msra.mxu0 0.0
  %809 = vmatprep.subr.mxu0 0.0
  %810 = vmatpush1.xpose.msra.mxu0 0.0
  %811 = vmatprep.subr.mxu0 0.0
  %812 = vmatpush1.xpose.msra.mxu0 0.0
  %813 = vmatprep.subr.mxu0 0.0
  %814 = vmatpush1.xpose.msra.mxu0 0.0
  %815 = vmatprep.mubr.f32.mxu0 0.0
  %816 = vmatmul.mubr.f32.gmra.mrb[0].mxu0 %v701
  %v817 = vpop.f32.mrb[0].mxu0
  %v818 = vadd.f32 0.0, %v817
  %v819 = vpop.f32.mrb[0].mxu0
  %820 = vdwg.mxu0
  %v822 = vsel %vm699, %v683, 0
  %v825 = vsel %vm699, %v684, 0
  %v828 = vsel %vm699, %v685, 0
  %v831 = vsel %vm699, %v686, 0
  %v834 = vsel %vm699, %v687, 0
  %v837 = vsel %vm699, %v688, 0
  %v840 = vsel %vm699, %v689, 0
  %v843 = vsel %vm699, %v690, 0
  %v846 = vsel %vm699, %v691, 0
  %v849 = vsel %vm699, %v692, 0
  %v852 = vsel %vm699, %v693, 0
  %v855 = vsel %vm699, %v694, 0
  %v858 = vsel %vm699, %v695, 0
  %v861 = vsel %vm699, %v696, 0
  %v864 = vsel %vm699, %v697, 0
  %v867 = vsel %vm699, %v698, 0
  %869 = vmatprep.subr.mxu0 0.0
  %870 = vmatpush1.xpose.msra.mxu0 %v822
  %871 = vmatprep.subr.mxu0 0.0
  %872 = vmatpush1.xpose.msra.mxu0 %v825
  %873 = vmatprep.subr.mxu0 0.0
  %874 = vmatpush1.xpose.msra.mxu0 %v828
  %875 = vmatprep.subr.mxu0 0.0
  %876 = vmatpush1.xpose.msra.mxu0 %v831
  %877 = vmatprep.subr.mxu0 0.0
  %878 = vmatpush1.xpose.msra.mxu0 %v834
  %879 = vmatprep.subr.mxu0 0.0
  %880 = vmatpush1.xpose.msra.mxu0 %v837
  %881 = vmatprep.subr.mxu0 0.0
  %882 = vmatpush1.xpose.msra.mxu0 %v840
  %883 = vmatprep.subr.mxu0 0.0
  %884 = vmatpush1.xpose.msra.mxu0 %v843
  %885 = vmatprep.subr.mxu0 0.0
  %886 = vmatpush1.xpose.msra.mxu0 %v846
  %887 = vmatprep.subr.mxu0 0.0
  %888 = vmatpush1.xpose.msra.mxu0 %v849
  %889 = vmatprep.subr.mxu0 0.0
  %890 = vmatpush1.xpose.msra.mxu0 %v852
  %891 = vmatprep.subr.mxu0 0.0
  %892 = vmatpush1.xpose.msra.mxu0 %v855
  %893 = vmatprep.subr.mxu0 0.0
  %894 = vmatpush1.xpose.msra.mxu0 %v858
  %895 = vmatprep.subr.mxu0 0.0
  %896 = vmatpush1.xpose.msra.mxu0 %v861
  %897 = vmatprep.subr.mxu0 0.0
  %898 = vmatpush1.xpose.msra.mxu0 %v864
  %899 = vmatprep.subr.mxu0 0.0
  %900 = vmatpush1.xpose.msra.mxu0 %v867
  %901 = vmatprep.subr.mxu0 0.0
  %902 = vmatpush1.xpose.msra.mxu0 0.0
  %903 = vmatprep.subr.mxu0 0.0
  %904 = vmatpush1.xpose.msra.mxu0 0.0
  %905 = vmatprep.subr.mxu0 0.0
  %906 = vmatpush1.xpose.msra.mxu0 0.0
  %907 = vmatprep.subr.mxu0 0.0
  %908 = vmatpush1.xpose.msra.mxu0 0.0
  %909 = vmatprep.subr.mxu0 0.0
  %910 = vmatpush1.xpose.msra.mxu0 0.0
  %911 = vmatprep.subr.mxu0 0.0
  %912 = vmatpush1.xpose.msra.mxu0 0.0
  %913 = vmatprep.subr.mxu0 0.0
  %914 = vmatpush1.xpose.msra.mxu0 0.0
  %915 = vmatprep.subr.mxu0 0.0
  %916 = vmatpush1.xpose.msra.mxu0 0.0
  %917 = vmatprep.subr.mxu0 0.0
  %918 = vmatpush1.xpose.msra.mxu0 0.0
  %919 = vmatprep.subr.mxu0 0.0
  %920 = vmatpush1.xpose.msra.mxu0 0.0
  %921 = vmatprep.subr.mxu0 0.0
  %922 = vmatpush1.xpose.msra.mxu0 0.0
  %923 = vmatprep.subr.mxu0 0.0
  %924 = vmatpush1.xpose.msra.mxu0 0.0
  %925 = vmatprep.subr.mxu0 0.0
  %926 = vmatpush1.xpose.msra.mxu0 0.0
  %927 = vmatprep.subr.mxu0 0.0
  %928 = vmatpush1.xpose.msra.mxu0 0.0
  %929 = vmatprep.subr.mxu0 0.0
  %930 = vmatpush1.xpose.msra.mxu0 0.0
  %931 = vmatprep.subr.mxu0 0.0
  %932 = vmatpush1.xpose.msra.mxu0 0.0
  %933 = vmatprep.mubr.f32.mxu0 0.0
  %934 = vmatmul.mubr.f32.gmra.mrb[0].mxu0 %v701
  %v935 = vpop.f32.mrb[0].mxu0
  %v936 = vadd.f32 0.0, %v935
  %v937 = vpop.f32.mrb[0].mxu0
  %938 = vdwg.mxu0
  %v939 = vstv %s598
  %v940 = vadd.f32 %v818, %v939
  %v941 = vadd.f32 %v936, %v939
  %v942 = vld [vmem:[%s3] sm:$0x1]
  %v944 = vrot.slane %v940, 1
  %v946 = vmul.f32 %v942, %v944
  %v947 = vld [vmem:[%s3 + $0x1] sm:$0x1]
  %v949 = vrot.slane %v941, 1
  %v951 = vmul.f32 %v947, %v949
  %952 = vst [vmem:[%s8 - $0x1] sm:$0x2] %v940
  %953 = vst [vmem:[%s8 + $0x1] sm:$0x1] %v946
  %954 = vst [vmem:[%s8 + $0x1] sm:$0x2] %v941
  %955 = vst [vmem:[%s8 + $0x3] sm:$0x1] %v951
  // Predicated region
  $region34: #{weighted_mine_forward.1} parent=0 // pred_check
    _
  $region35: #{weighted_mine_forward.1} parent=0 // pred_check_branch
    %957 = sbr.rel (0) target = $region37
  $region36: #{weighted_mine_forward.1} parent=0 // pred_region
    _
  $region37: #{weighted_mine_forward.1} parent=0 // pred_fallthru
    _
  // Predicated region
  $region38: #{weighted_mine_forward.1} parent=0 // pred_check
    _
  $region39: #{weighted_mine_forward.1} parent=0 // pred_check_branch
    %959 = sbr.rel (0) target = $region41
  $region40: #{weighted_mine_forward.1} parent=0 // pred_region
    _
  $region41: #{weighted_mine_forward.1} parent=0 // pred_fallthru
    _

</llo_original>
